<compile_context>
chip_gen: v7x
topology: tpu7x:2x2x1
jax: 0.10.0
libtpu: 0.0.40
codegen_flags: <defaults>
</compile_context>

<pallas_src>
import functools

import jax
import jax.numpy as jnp
from jax.experimental import pallas as pl
from jax.experimental.pallas import tpu as pltpu

ALPHA = 1.0   # FocalLoss(alpha=1, gamma=2)
GAMMA = 2.0   # gamma == 2 -> explicit square in the kernel

NUM_SPLITS = 2  # leading "parallel" grid axis; maps to the 2 TCs on v7x


def focal_loss_kernel(logits_ref, targets_ref, wt_ref, out_ref, acc_ref, *,
                      n_total, tile_n, tiles_per_split):
    c = pl.program_id(0)          # split index (parallel across cores)
    j = pl.program_id(1)          # batch-tile index within the split (reduction)

    @pl.when(j == 0)
    def _init():
        acc_ref[...] = jnp.zeros_like(acc_ref)

    x = logits_ref[...].astype(jnp.float32)       # (tile_n, C), cast in-kernel
    t = targets_ref[...]                          # (tile_n, 1) int32
    w_t = wt_ref[...]                             # (tile_n, 1) f32 (wrapper gather)
    tn, nc = x.shape

    # --- stable log-softmax, but only the target-class log-prob is formed ---
    m = jnp.max(x, axis=-1, keepdims=True)
    z = x - m
    lse = jnp.log(jnp.sum(jnp.exp(z), axis=-1, keepdims=True))      # (tile_n, 1)
    class_ids = jax.lax.broadcasted_iota(jnp.int32, (tn, nc), 1)
    z_t = jnp.sum(jnp.where(class_ids == t, z, 0.0), axis=-1, keepdims=True)
    log_pt = z_t - lse                                              # (tile_n, 1)

    # --- weighted CE + focal modulation (column ops only) ---
    ce = -w_t * log_pt
    pt = jnp.exp(-ce)                      # == p_t^{w_t}, matching the module
    one_minus_pt = 1.0 - pt
    focal = ALPHA * (one_minus_pt * one_minus_pt) * ce              # gamma == 2

    # --- mask padded rows (wrapper pads N up to NUM_SPLITS*tiles*tile_n) ---
    rows = ((c * tiles_per_split + j) * tile_n
            + jax.lax.broadcasted_iota(jnp.int32, (tn, 1), 0))
    valid = (rows < n_total).astype(jnp.float32)

    acc_ref[...] += focal * valid

    @pl.when(j == pl.num_programs(1) - 1)
    def _finalize():
        total = jnp.sum(acc_ref[...], axis=0, keepdims=True)        # (1, 1)
        out_ref[...] = total.reshape(1, 1, 1)


def focal_loss(logits, targets, weight, *, tile_n=None):
    """logits: (N, C) float, targets: (N,) int, weight: (C,) float -> scalar f32."""
    N, C = logits.shape
    itemsize = logits.dtype.itemsize
    sublane = {4: 8, 2: 16, 1: 32}.get(itemsize, 8)   # dtype-correct sublane multiple

    if tile_n is None:
        # ~8 MiB per logits buffer: big enough to amortize the ~0.35 us/step
        # overhead even for small C, small enough that the double-buffered
        # footprint stays well under v7x's 64 MiB-per-TC VMEM.
        bytes_per_row = C * itemsize
        tile_n = int((8 * 1024 * 1024) // max(bytes_per_row, 1))
    tile_n = max(sublane, (int(tile_n) // sublane) * sublane)
    # never larger than the (sublane-padded) rows a single split needs
    rows_per_split = -(-N // NUM_SPLITS)
    rows_per_split = -(-rows_per_split // sublane) * sublane
    tile_n = min(tile_n, max(sublane, rows_per_split))

    tiles_per_split = pl.cdiv(pl.cdiv(N, tile_n), NUM_SPLITS)
    n_pad = NUM_SPLITS * tiles_per_split * tile_n

    # Keep logits in their native HBM dtype (cast happens in-kernel).
    logits_p = logits
    targets_p = targets.astype(jnp.int32)
    if n_pad != N:
        logits_p = jnp.pad(logits_p, ((0, n_pad - N), (0, 0)))
        targets_p = jnp.pad(targets_p, ((0, n_pad - N),))
    # Per-row class weight gathered in the wrapper (N*4 bytes << N*C logits).
    w_t = weight.astype(jnp.float32)[targets_p].reshape(n_pad, 1)
    t2 = targets_p.reshape(n_pad, 1)

    kernel = functools.partial(focal_loss_kernel, n_total=N, tile_n=tile_n,
                               tiles_per_split=tiles_per_split)

    in_bytes = n_pad * C * itemsize + n_pad * 8
    cost = pl.CostEstimate(flops=6 * n_pad * C,
                           transcendentals=n_pad * C + 3 * n_pad,
                           bytes_accessed=in_bytes + 8)

    # Double-buffered inputs + scratch + margin; clamped so it is safe on
    # every generation (v5e raised above its 16 MiB scoped default, v7x kept
    # well under its 64 MiB physical VMEM per TC).
    tile_bytes = tile_n * (C * itemsize + 8)
    vmem_limit = int(min(max(2 * (2 * tile_bytes + tile_n * 4) + (2 << 20),
                             32 * 1024 * 1024),
                         48 * 1024 * 1024))

    partials = pl.pallas_call(
        kernel,
        out_shape=jax.ShapeDtypeStruct((NUM_SPLITS, 1, 1), jnp.float32),
        grid=(NUM_SPLITS, tiles_per_split),
        in_specs=[
            pl.BlockSpec((tile_n, C), lambda c, j: (c * tiles_per_split + j, 0)),
            pl.BlockSpec((tile_n, 1), lambda c, j: (c * tiles_per_split + j, 0)),
            pl.BlockSpec((tile_n, 1), lambda c, j: (c * tiles_per_split + j, 0)),
        ],
        out_specs=pl.BlockSpec((1, 1, 1), lambda c, j: (c, 0, 0)),  # per-split partial
        scratch_shapes=[pltpu.VMEM((tile_n, 1), jnp.float32)],
        compiler_params=pltpu.CompilerParams(
            dimension_semantics=("parallel", "arbitrary"),
            vmem_limit_bytes=vmem_limit,
        ),
        cost_estimate=cost,
    )(logits_p, t2, w_t)

    return jnp.sum(partials) / jnp.float32(N)


def focal_loss_ref(logits, targets, weight):
    """Pure-JAX reference mirroring the PyTorch module."""
    logp = jax.nn.log_softmax(logits.astype(jnp.float32), axis=-1)
    log_pt = jnp.take_along_axis(logp, targets[:, None].astype(jnp.int32),
                                 axis=-1)[:, 0]
    w_t = weight.astype(jnp.float32)[targets]
    ce = -w_t * log_pt
    pt = jnp.exp(-ce)
    return jnp.mean(ALPHA * (1.0 - pt) ** GAMMA * ce)


if __name__ == "__main__":
    key = jax.random.PRNGKey(0)
    k1, k2, k3, k4 = jax.random.split(key, 4)

    # Small case (single tile per split), (batch, classes) inputs like the module.
    N, C = 8, 16
    logits = jax.random.normal(k1, (N, C), dtype=jnp.float32)
    targets = jax.random.randint(k2, (N,), 0, C, dtype=jnp.int32)
    weight = 0.5 + jnp.arange(C, dtype=jnp.float32) / C   # per-class weights

    out = jax.block_until_ready(focal_loss(logits, targets, weight))
    ref = focal_loss_ref(logits, targets, weight)
    assert jnp.allclose(out, ref, rtol=1e-5, atol=1e-5), (out, ref)

    # Multi-tile + padding/masking path (N not a multiple of the tile size).
    N2, C2 = 300, 16
    logits2 = jax.random.normal(k3, (N2, C2), dtype=jnp.float32)
    targets2 = jax.random.randint(k4, (N2,), 0, C2, dtype=jnp.int32)
    weight2 = 0.5 + jnp.arange(C2, dtype=jnp.float32) / C2

    out2 = jax.block_until_ready(focal_loss(logits2, targets2, weight2, tile_n=64))
    ref2 = focal_loss_ref(logits2, targets2, weight2)
    assert jnp.allclose(out2, ref2, rtol=1e-5, atol=1e-5), (out2, ref2)

    print("KERNEL_OK")
</pallas_src>

<mosaic_0001>
module attributes {stable_mosaic.version = 11 : i64} {
  func.func @focal_loss_kernel(%arg0: i32, %arg1: i32, %arg2: memref<8x16xf32, #tpu.memory_space<vmem>>, %arg3: memref<8x1xi32, #tpu.memory_space<vmem>>, %arg4: memref<8x1xf32, #tpu.memory_space<vmem>>, %arg5: memref<1x1x1xf32, #tpu.memory_space<vmem>>, %arg6: memref<8x1xf32, #tpu.memory_space<vmem>>) attributes {dimension_semantics = [#tpu.dimension_semantics<parallel>, #tpu.dimension_semantics<arbitrary>], iteration_bounds = array<i64: 2, 1>, scalar_prefetch = 0 : i64, scratch_operands = 1 : i64, tpu.core_type = #tpu.core_type<tc>, window_params = [{transform_indices = @transform_0, window_bounds = array<i64: 8, 16>}, {transform_indices = @transform_1, window_bounds = array<i64: 8, 1>}, {transform_indices = @transform_2, window_bounds = array<i64: 8, 1>}, {transform_indices = @transform_3, window_bounds = array<i64: 1, 1, 1>}]} {
    %c0_i32 = arith.constant 0 : i32
    %0 = arith.cmpi eq, %arg1, %c0_i32 : i32
    %1 = arith.extui %0 : i1 to i32
    %c0_i32_0 = arith.constant 0 : i32
    %2 = arith.cmpi ne, %1, %c0_i32_0 : i32
    scf.if %2 {
      %cst_20 = arith.constant 0.000000e+00 : f32
      %51 = vector.broadcast %cst_20 : f32 to vector<8x1xf32>
      %c0_21 = arith.constant 0 : index
      %c0_22 = arith.constant 0 : index
      %52 = vector.load %arg6[%c0_21, %c0_22] : memref<8x1xf32, #tpu.memory_space<vmem>>, vector<8x1xf32>
      tpu.vector_store %arg6[%c0_21, %c0_22], %51 {strides = array<i32>} : memref<8x1xf32, #tpu.memory_space<vmem>>, vector<8x1xf32>,
    } else {
    }
    %c0 = arith.constant 0 : index
    %c0_1 = arith.constant 0 : index
    %3 = vector.load %arg2[%c0, %c0_1] : memref<8x16xf32, #tpu.memory_space<vmem>>, vector<8x16xf32>
    %c0_2 = arith.constant 0 : index
    %c0_3 = arith.constant 0 : index
    %4 = vector.load %arg3[%c0_2, %c0_3] : memref<8x1xi32, #tpu.memory_space<vmem>>, vector<8x1xi32>
    %c0_4 = arith.constant 0 : index
    %c0_5 = arith.constant 0 : index
    %5 = vector.load %arg4[%c0_4, %c0_5] : memref<8x1xf32, #tpu.memory_space<vmem>>, vector<8x1xf32>
    %cst = arith.constant dense<0xFF800000> : vector<8xf32>
    %6 = vector.multi_reduction <maximumf>, %3, %cst [1] : vector<8x16xf32> to vector<8xf32>
    %7 = vector.shape_cast %6 : vector<8xf32> to vector<8x1xf32>
    %8 = vector.broadcast %7 : vector<8x1xf32> to vector<8x16xf32>
    %9 = arith.subf %3, %8 : vector<8x16xf32>
    %10 = math.exp %9 : vector<8x16xf32>
    %cst_6 = arith.constant dense<0.000000e+00> : vector<8xf32>
    %11 = vector.multi_reduction <add>, %10, %cst_6 [1] : vector<8x16xf32> to vector<8xf32>
    %12 = vector.shape_cast %11 : vector<8xf32> to vector<8x1xf32>
    %13 = math.log %12 : vector<8x1xf32>
    %14 = tpu.iota {dimensions = array<i32: 1>} : vector<8x16xi32>
    %15 = vector.broadcast %4 : vector<8x1xi32> to vector<8x16xi32>
    %16 = arith.cmpi eq, %14, %15 : vector<8x16xi32>
    %cst_7 = arith.constant 0.000000e+00 : f32
    %17 = vector.broadcast %cst_7 : f32 to vector<8x16xf32>
    %18 = arith.select %16, %9, %17 : vector<8x16xi1>, vector<8x16xf32>
    %cst_8 = arith.constant dense<0.000000e+00> : vector<8xf32>
    %19 = vector.multi_reduction <add>, %18, %cst_8 [1] : vector<8x16xf32> to vector<8xf32>
    %20 = vector.shape_cast %19 : vector<8xf32> to vector<8x1xf32>
    %21 = arith.subf %20, %13 : vector<8x1xf32>
    %cst_9 = arith.constant 0.000000e+00 : f32
    %22 = vector.broadcast %cst_9 : f32 to vector<8x1xf32>
    %23 = arith.subf %22, %5 : vector<8x1xf32>
    %24 = arith.mulf %23, %21 : vector<8x1xf32>
    %cst_10 = arith.constant 0.000000e+00 : f32
    %25 = vector.broadcast %cst_10 : f32 to vector<8x1xf32>
    %26 = arith.subf %25, %24 : vector<8x1xf32>
    %27 = math.exp %26 : vector<8x1xf32>
    %cst_11 = arith.constant 1.000000e+00 : f32
    %28 = vector.broadcast %cst_11 : f32 to vector<8x1xf32>
    %29 = arith.subf %28, %27 : vector<8x1xf32>
    %30 = arith.mulf %29, %29 : vector<8x1xf32>
    %cst_12 = arith.constant 1.000000e+00 : f32
    %31 = vector.broadcast %cst_12 : f32 to vector<8x1xf32>
    %32 = arith.mulf %31, %30 : vector<8x1xf32>
    %33 = arith.mulf %32, %24 : vector<8x1xf32>
    %c1_i32 = arith.constant 1 : i32
    %34 = arith.muli %arg0, %c1_i32 : i32
    %35 = arith.addi %34, %arg1 : i32
    %c8_i32 = arith.constant 8 : i32
    %36 = arith.muli %35, %c8_i32 : i32
    %37 = tpu.iota {dimensions = array<i32: 0>} : vector<8x1xi32>
    %38 = vector.broadcast %36 : i32 to vector<8x1xi32>
    %39 = arith.addi %38, %37 : vector<8x1xi32>
    %c8_i32_13 = arith.constant 8 : i32
    %40 = vector.broadcast %c8_i32_13 : i32 to vector<8x1xi32>
    %41 = arith.cmpi slt, %39, %40 : vector<8x1xi32>
    %42 = arith.extui %41 : vector<8x1xi1> to vector<8x1xi32>
    %43 = arith.sitofp %42 : vector<8x1xi32> to vector<8x1xf32>
    %c0_14 = arith.constant 0 : index
    %c0_15 = arith.constant 0 : index
    %44 = vector.load %arg6[%c0_14, %c0_15] : memref<8x1xf32, #tpu.memory_space<vmem>>, vector<8x1xf32>
    %45 = arith.mulf %33, %43 : vector<8x1xf32>
    %46 = arith.addf %44, %45 : vector<8x1xf32>
    %c0_16 = arith.constant 0 : index
    %c0_17 = arith.constant 0 : index
    %47 = vector.load %arg6[%c0_16, %c0_17] : memref<8x1xf32, #tpu.memory_space<vmem>>, vector<8x1xf32>
    tpu.vector_store %arg6[%c0_16, %c0_17], %46 {strides = array<i32>} : memref<8x1xf32, #tpu.memory_space<vmem>>, vector<8x1xf32>,
    %c0_i32_18 = arith.constant 0 : i32
    %48 = arith.cmpi eq, %arg1, %c0_i32_18 : i32
    %49 = arith.extui %48 : i1 to i32
    %c0_i32_19 = arith.constant 0 : i32
    %50 = arith.cmpi ne, %49, %c0_i32_19 : i32
    scf.if %50 {
      %c0_20 = arith.constant 0 : index
      %c0_21 = arith.constant 0 : index
      %51 = vector.load %arg6[%c0_20, %c0_21] : memref<8x1xf32, #tpu.memory_space<vmem>>, vector<8x1xf32>
      %cst_22 = arith.constant dense<0.000000e+00> : vector<1xf32>
      %52 = vector.multi_reduction <add>, %51, %cst_22 [0] : vector<8x1xf32> to vector<1xf32>
      %53 = vector.shape_cast %52 : vector<1xf32> to vector<1x1xf32>
      %54 = vector.shape_cast %53 : vector<1x1xf32> to vector<1x1x1xf32>
      %c0_23 = arith.constant 0 : index
      %c0_24 = arith.constant 0 : index
      %c0_25 = arith.constant 0 : index
      %55 = vector.load %arg5[%c0_23, %c0_24, %c0_25] : memref<1x1x1xf32, #tpu.memory_space<vmem>>, vector<1x1x1xf32>
      tpu.vector_store %arg5[%c0_23, %c0_24, %c0_25], %54 {strides = array<i32>} : memref<1x1x1xf32, #tpu.memory_space<vmem>>, vector<1x1x1xf32>,
    } else {
    }
    return
  }
  func.func @transform_0(%arg0: i32, %arg1: i32) -> (i32, i32) {
    %c1_i32 = arith.constant 1 : i32
    %0 = arith.muli %arg0, %c1_i32 : i32
    %1 = arith.addi %0, %arg1 : i32
    %c0_i32 = arith.constant 0 : i32
    %c0_i32_0 = arith.constant 0 : i32
    return %1, %c0_i32 : i32, i32
  }
  func.func @transform_1(%arg0: i32, %arg1: i32) -> (i32, i32) {
    %c1_i32 = arith.constant 1 : i32
    %0 = arith.muli %arg0, %c1_i32 : i32
    %1 = arith.addi %0, %arg1 : i32
    %c0_i32 = arith.constant 0 : i32
    %c0_i32_0 = arith.constant 0 : i32
    return %1, %c0_i32 : i32, i32
  }
  func.func @transform_2(%arg0: i32, %arg1: i32) -> (i32, i32) {
    %c1_i32 = arith.constant 1 : i32
    %0 = arith.muli %arg0, %c1_i32 : i32
    %1 = arith.addi %0, %arg1 : i32
    %c0_i32 = arith.constant 0 : i32
    %c0_i32_0 = arith.constant 0 : i32
    return %1, %c0_i32 : i32, i32
  }
  func.func @transform_3(%arg0: i32, %arg1: i32) -> (i32, i32, i32) {
    %c0_i32 = arith.constant 0 : i32
    %c0_i32_0 = arith.constant 0 : i32
    %c0_i32_1 = arith.constant 0 : i32
    return %arg0, %c0_i32, %c0_i32_0 : i32, i32, i32
  }
}

</mosaic_0001>

<llo_original>
// kernel: tpu_custom_call.1
$region0: #{tpu_custom_call.1}
  #allocation0 [shape = 'u32[]', space=smem, size = 0x4, offset = 0x4, fixed_abs, tag = 'smem constant byte address 0x4 - core index']
  #allocation1 [shape = 'u32[144,128]{1,0:T(1,128)}', space=vmem, size = 0x12000, scoped, tag = 'internal scratch']
  #allocation2 [shape = 'f32[8,1]{1,0:T(8,128)}', space=vmem, size = 0x1000, scoped, tag = 'scratch operand']
  %s0 = inlined_call_operand.vmem [shape: f32[16,16], index: 0, kind: input, shape index: {}]
  %s1 = inlined_call_operand.vmem [shape: s32[16,1], index: 1, kind: input, shape index: {}]
  %s2 = inlined_call_operand.vmem [shape: f32[16,1], index: 2, kind: input, shape index: {}]
  %s3 = inlined_call_operand.vmem [shape: f32[2,1,1], index: 3, kind: output, shape index: {}]
  %s4 = sld [smem:[#allocation0]]
  $region53: #{tpu_custom_call.1} parent=0
    _
  %s6 = ssub.s32 1, %s4
  %s7 = scalar_select 0, %s6, %s4
  loop: start=0, step=1, limit=4
  $region2: #{tpu_custom_call.1} parent=0 // loop_pre_header
    _
  $region3: #{tpu_custom_call.1} parent=0 // loop_header
    %s9 = sphi 0, %s13
    %p10 = scmp.ge.s32.totalorder %s9, 4
    %s16 = sphi 0, %s28
    %s17 = sphi 0, %s24
    %s18 = sphi 0, %s16
    %s19 = sphi 0, %s17
    %s20 = sphi 0, %s18
    %s21 = sphi 0, %s19
    %s33 = sphi 0, %s35
    %s36 = sphi 0, %s33
    %s37 = sphi 0, %s36
    %s53 = sphi 0, %s37
    %s61 = sphi 0, %s63
    %s64 = sphi 0, %s61
    %s65 = sphi 0, %s64
    %s81 = sphi 0, %s65
    %s89 = sphi 0, %s91
    %s92 = sphi 0, %s89
    %s93 = sphi 0, %s92
    %s109 = sphi 0, %s93
    %s115 = sphi 0, %s117
    %s118 = sphi 0, %s115
    %s119 = sphi 0, %s118
    %s135 = sphi 0, %s119
  $region4: #{tpu_custom_call.1} parent=0 // loop_header_branch
    %12 = sbr.rel (%p10) target = $region8
  $region5: #{tpu_custom_call.1} parent=0 // loop_body
    %s14 = ssub.s32 %s9, 1
    %s15 = ssub.s32 %s9, 2
    %s22 = sadd.s32 1, %s17
    %p23 = scmp.ge.s32.totalorder %s22, 1
    %s24 = scalar_select %p23, 0, %s22
    %s25 = sadd.s32 1, %s16
    %s26 = scalar_select %p23, %s25, %s16
    %p27 = scmp.ge.s32.totalorder %s26, 2
    %s28 = scalar_select %p27, 0, %s26
    %s29 = sadd.s32 %s16, %s17
    %s30 = sadd.s32 %s28, %s24
    %s31 = ssub.s32 %s29, %s30
    %p32 = scmp.eq.s32.totalorder %s31, 0
    %s34 = sadd.s32 %s33, 1
    %s35 = scalar_select %p32, %s33, %s34
    %p38 = pneg %p32
    %p39 = scmp.eq.s32.totalorder %s9, 1
    %p40 = por %p38, %p39
    %p41 = scmp.ne.s32.totalorder %s33, %s36
    %p42 = scmp.eq.s32.totalorder %s9, 0
    %p43 = por %p41, %p42
    %p44 = scmp.ne.s32.totalorder %s33, %s36
    %p45 = scmp.eq.s32.totalorder %s14, 1
    %p46 = por %p44, %p45
    %p47 = scmp.ne.s32.totalorder %s36, %s37
    %p48 = scmp.eq.s32.totalorder %s14, 0
    %p49 = por %p47, %p48
    %p50 = scmp.ne.s32.totalorder %s36, %s37
    %p51 = scmp.eq.s32.totalorder %s15, 1
    %p52 = por %p50, %p51
    %p54 = scmp.ne.s32.totalorder %s37, %s53
    %p55 = scmp.eq.s32.totalorder %s15, 0
    %p56 = por %p54, %p55
    %s57 = sadd.s32 %s16, %s17
    %s58 = sadd.s32 %s28, %s24
    %s59 = ssub.s32 %s57, %s58
    %p60 = scmp.eq.s32.totalorder %s59, 0
    %s62 = sadd.s32 %s61, 1
    %s63 = scalar_select %p60, %s61, %s62
    %p66 = pneg %p60
    %p67 = scmp.eq.s32.totalorder %s9, 1
    %p68 = por %p66, %p67
    %p69 = scmp.ne.s32.totalorder %s61, %s64
    %p70 = scmp.eq.s32.totalorder %s9, 0
    %p71 = por %p69, %p70
    %p72 = scmp.ne.s32.totalorder %s61, %s64
    %p73 = scmp.eq.s32.totalorder %s14, 1
    %p74 = por %p72, %p73
    %p75 = scmp.ne.s32.totalorder %s64, %s65
    %p76 = scmp.eq.s32.totalorder %s14, 0
    %p77 = por %p75, %p76
    %p78 = scmp.ne.s32.totalorder %s64, %s65
    %p79 = scmp.eq.s32.totalorder %s15, 1
    %p80 = por %p78, %p79
    %p82 = scmp.ne.s32.totalorder %s65, %s81
    %p83 = scmp.eq.s32.totalorder %s15, 0
    %p84 = por %p82, %p83
    %s85 = sadd.s32 %s16, %s17
    %s86 = sadd.s32 %s28, %s24
    %s87 = ssub.s32 %s85, %s86
    %p88 = scmp.eq.s32.totalorder %s87, 0
    %s90 = sadd.s32 %s89, 1
    %s91 = scalar_select %p88, %s89, %s90
    %p94 = pneg %p88
    %p95 = scmp.eq.s32.totalorder %s9, 1
    %p96 = por %p94, %p95
    %p97 = scmp.ne.s32.totalorder %s89, %s92
    %p98 = scmp.eq.s32.totalorder %s9, 0
    %p99 = por %p97, %p98
    %p100 = scmp.ne.s32.totalorder %s89, %s92
    %p101 = scmp.eq.s32.totalorder %s14, 1
    %p102 = por %p100, %p101
    %p103 = scmp.ne.s32.totalorder %s92, %s93
    %p104 = scmp.eq.s32.totalorder %s14, 0
    %p105 = por %p103, %p104
    %p106 = scmp.ne.s32.totalorder %s92, %s93
    %p107 = scmp.eq.s32.totalorder %s15, 1
    %p108 = por %p106, %p107
    %p110 = scmp.ne.s32.totalorder %s93, %s109
    %p111 = scmp.eq.s32.totalorder %s15, 0
    %p112 = por %p110, %p111
    %s113 = ssub.s32 %s16, %s28
    %p114 = scmp.eq.s32.totalorder %s113, 0
    %s116 = sadd.s32 %s115, 1
    %s117 = scalar_select %p114, %s115, %s116
    %p120 = pneg %p114
    %p121 = scmp.eq.s32.totalorder %s9, 1
    %p122 = por %p120, %p121
    %p123 = scmp.ne.s32.totalorder %s115, %s118
    %p124 = scmp.eq.s32.totalorder %s9, 0
    %p125 = por %p123, %p124
    %p126 = scmp.ne.s32.totalorder %s115, %s118
    %p127 = scmp.eq.s32.totalorder %s14, 1
    %p128 = por %p126, %p127
    %p129 = scmp.ne.s32.totalorder %s118, %s119
    %p130 = scmp.eq.s32.totalorder %s14, 0
    %p131 = por %p129, %p130
    %p132 = scmp.ne.s32.totalorder %s118, %s119
    %p133 = scmp.eq.s32.totalorder %s15, 1
    %p134 = por %p132, %p133
    %p136 = scmp.ne.s32.totalorder %s119, %s135
    %p137 = scmp.eq.s32.totalorder %s15, 0
    %p138 = por %p136, %p137
    %p139 = scmp.le.s32.totalorder 1, %s9
    %p140 = scmp.lt.s32.totalorder %s9, 3
    %p141 = pnand %p139, %p140
    %p142 = pneg %p141
    // Predicated region
    $region9: #{tpu_custom_call.1} parent=5 // pred_check
      _
    $region10: #{tpu_custom_call.1} parent=5 // pred_check_branch
      %144 = sbr.rel (%p141) target = $region12
    $region11: #{tpu_custom_call.1} parent=5 // pred_region
      %s145 = ssub.s32 %s9, 1
    $region12: #{tpu_custom_call.1} parent=5 // pred_fallthru
      _
    %p146 = scmp.lt.s32.totalorder %s9, 2
    // Predicated region
    $region13: #{tpu_custom_call.1} parent=5 // pred_check
      %p147 = pneg %p146
    $region14: #{tpu_custom_call.1} parent=5 // pred_check_branch
      %149 = sbr.rel (%p147) target = $region16
    $region15: #{tpu_custom_call.1} parent=5 // pred_region
      // Predicated region
      $region17: #{tpu_custom_call.1} parent=15 // pred_check
        %p150 = pneg %p43
      $region18: #{tpu_custom_call.1} parent=15 // pred_check_branch
        %152 = sbr.rel (%p150) target = $region20
      $region19: #{tpu_custom_call.1} parent=15 // pred_region
        %s153 = sadd.s32 %s16, %s17
        %p154 = scmp.lt.s32.totalorder %s153, 1
        %s155 = scalar_select %p154, %s153, 1
        %s156 = smul.addr %s155, 8
        %s157 = scalar_lea.vmem %s0, %s156
        %s158 = sadd.s32 %s16, %s17
      $region20: #{tpu_custom_call.1} parent=15 // pred_fallthru
        _
      // Predicated region
      $region21: #{tpu_custom_call.1} parent=15 // pred_check
        %p159 = pneg %p71
      $region22: #{tpu_custom_call.1} parent=15 // pred_check_branch
        %161 = sbr.rel (%p159) target = $region24
      $region23: #{tpu_custom_call.1} parent=15 // pred_region
        %s162 = sadd.s32 %s16, %s17
        %p163 = scmp.lt.s32.totalorder %s162, 1
        %s164 = scalar_select %p163, %s162, 1
        %s165 = smul.addr %s164, 8
        %s166 = scalar_lea.vmem %s1, %s165
        %s167 = sadd.s32 %s16, %s17
      $region24: #{tpu_custom_call.1} parent=15 // pred_fallthru
        _
      // Predicated region
      $region25: #{tpu_custom_call.1} parent=15 // pred_check
        %p168 = pneg %p99
      $region26: #{tpu_custom_call.1} parent=15 // pred_check_branch
        %170 = sbr.rel (%p168) target = $region28
      $region27: #{tpu_custom_call.1} parent=15 // pred_region
        %s171 = sadd.s32 %s16, %s17
        %p172 = scmp.lt.s32.totalorder %s171, 1
        %s173 = scalar_select %p172, %s171, 1
        %s174 = smul.addr %s173, 8
        %s175 = scalar_lea.vmem %s2, %s174
        %s176 = sadd.s32 %s16, %s17
      $region28: #{tpu_custom_call.1} parent=15 // pred_fallthru
        _
    $region16: #{tpu_custom_call.1} parent=5 // pred_fallthru
      _
    %p177 = scmp.le.s32.totalorder 1, %s9
    %p178 = scmp.lt.s32.totalorder %s9, 3
    %p179 = pnand %p177, %p178
    %p180 = pneg %p179
    // Predicated region
    $region29: #{tpu_custom_call.1} parent=5 // pred_check
      _
    $region30: #{tpu_custom_call.1} parent=5 // pred_check_branch
      %182 = sbr.rel (%p179) target = $region32
    $region31: #{tpu_custom_call.1} parent=5 // pred_region
      %s183 = ssub.s32 %s9, 1
      %s184 = sadd.s32 %s18, %s19
      %p185 = scmp.lt.s32.totalorder %s184, 1
      %s186 = scalar_select %p185, %s184, 1
      %s187 = smul.addr %s186, 8
      %s188 = scalar_lea.vmem %s0, %s187
      %p189 = pneg %p49
      %p190 = pneg %p46
      %s191 = sadd.s32 %s18, %s19
      %p192 = scmp.lt.s32.totalorder %s191, 1
      %s193 = scalar_select %p192, %s191, 1
      %s194 = smul.addr %s193, 8
      %s195 = scalar_lea.vmem %s1, %s194
      %p196 = pneg %p77
      %p197 = pneg %p74
      %s198 = sadd.s32 %s18, %s19
      %p199 = scmp.lt.s32.totalorder %s198, 1
      %s200 = scalar_select %p199, %s198, 1
      %s201 = smul.addr %s200, 8
      %s202 = scalar_lea.vmem %s2, %s201
      %p203 = pneg %p105
      %p204 = pneg %p102
      %p205 = pneg %p131
      %p206 = pneg %p128
      %p207 = scmp.lt.s32.totalorder %s18, 1
      %s208 = scalar_select %p207, %s18, 1
      %s209 = scalar_lea.vmem %s3, %s208
      %s210 = sadd.s32 %s18, %s19
      %p211 = scmp.lt.s32.totalorder %s210, 1
      %s212 = scalar_select %p211, %s210, 1
      %s213 = smul.addr %s212, 8
      %s214 = scalar_lea.vmem %s0, %s213
      %s215 = sadd.s32 %s18, %s19
      %s216 = sadd.s32 %s18, %s19
      %p217 = scmp.lt.s32.totalorder %s216, 1
      %s218 = scalar_select %p217, %s216, 1
      %s219 = smul.addr %s218, 8
      %s220 = scalar_lea.vmem %s1, %s219
      %s221 = sadd.s32 %s18, %s19
      %s222 = sadd.s32 %s18, %s19
      %p223 = scmp.lt.s32.totalorder %s222, 1
      %s224 = scalar_select %p223, %s222, 1
      %s225 = smul.addr %s224, 8
      %s226 = scalar_lea.vmem %s2, %s225
      %s227 = sadd.s32 %s18, %s19
      %p228 = scmp.lt.s32.totalorder %s18, 1
      %s229 = scalar_select %p228, %s18, 1
      %s230 = scalar_lea.vmem %s3, %s229
      %p231 = scmp.eq.s32.totalorder %s19, 0
      // Predicated region
      $region33: #{tpu_custom_call.1} parent=31 // pred_check
        %p232 = pneg %p231
      $region34: #{tpu_custom_call.1} parent=31 // pred_check_branch
        %234 = sbr.rel (%p232) target = $region36
      $region35: #{tpu_custom_call.1} parent=31 // pred_region
        %vm235 = vcmask 7168
        %236 = vst.msk [vmem:[#allocation2] sm:$0xff] %vm235, 0.0
      $region36: #{tpu_custom_call.1} parent=31 // pred_fallthru
        _
      %v237 = vld [vmem:[%s214] sm:$0xff]
      %v238 = vld [vmem:[%s220] sm:$0xff]
      %v239 = vld [vmem:[%s226] sm:$0xff]
      %vm240 = vcmask 130048
      %v241 = vsel %vm240, %v237, -inf
      %242 = vmax.xlane.f32.xlu0 %v241
      %v243 = vpop.xlane.xlu0 %242
      %v244 = vsub.f32 %v237, %v243
      %v245 = vmul.f32 %v244, 1.442695
      %v246 = vpow.pop %v245
      %v247 = vsel %vm240, %v246, 0.0
      %248 = vadd.xlane.f32.xlu0 %v247
      %v249 = vpop.xlane.xlu0 %248
      %v250 = vlog2.pop %v249
      %v251 = vmul.f32 %v250, 0.6931472
      %v252 = vlaneseq
      %v253 = vand.u32 %v252, 127
      %254 = vset.pattern.permute.xlu0 0
      %255 = vperm.xlu0 %254, %v238
      %v256 = vpop.permute.xlu0 %255
      %vm257 = vcmp.eq.s32.totalorder %v253, %v256
      %v258 = vsel %vm257, %v244, 0.0
      %v259 = vsel %vm240, %v258, 0.0
      %260 = vadd.xlane.f32.xlu0 %v259
      %v261 = vpop.xlane.xlu0 %260
      %v262 = vsub.f32 %v261, %v251
      %v263 = vsub.f32 0.0, %v239
      %v264 = vmul.f32 %v263, %v262
      %v265 = vsub.f32 0.0, %v264
      %v266 = vmul.f32 %v265, 1.442695
      %v267 = vpow.pop %v266
      %v268 = vsub.f32 1.0, %v267
      %v269 = vmul.f32 %v268, %v268
      %v270 = vmul.f32 %v269, %v264
      %s271 = sadd.s32 %s18, %s19
      %s272 = smul.u32 %s271, 8
      %v273 = vlaneseq
      %v274 = vshrl.u32 %v273, 7
      %v275 = vstv %s272
      %v276 = vadd.s32 %v275, %v274
      %vm277 = vcmp.lt.s32.totalorder %v276, 8
      %v278 = vsel %vm277, 1, 0
      %v279 = vcvt.s32.f32 %v278
      %v280 = vld [vmem:[#allocation2] sm:$0xff]
      %v281 = vmul.f32 %v270, %v279
      %v282 = vadd.f32 %v280, %v281
      %vm283 = vcmask 7168
      %284 = vst.msk [vmem:[#allocation2] sm:$0xff] %vm283, %v282
      // Predicated region
      $region37: #{tpu_custom_call.1} parent=31 // pred_check
        %p285 = pneg %p231
      $region38: #{tpu_custom_call.1} parent=31 // pred_check_branch
        %287 = sbr.rel (%p285) target = $region40
      $region39: #{tpu_custom_call.1} parent=31 // pred_region
        %v288 = vld [vmem:[#allocation2] sm:$0xff]
        %v289 = vsel %vm283, %v288, 0.0
        %v290 = vrot.slane %v289, 4
        %v291 = vadd.f32 %v289, %v290
        %v292 = vrot.slane %v291, 2
        %v293 = vadd.f32 %v291, %v292
        %v294 = vrot.slane %v293, 1
        %v295 = vadd.f32 %v293, %v294
        %vm296 = vcmask 0
        %297 = vst.msk [vmem:[%s230] sm:$0x1] %vm296, %v295
      $region40: #{tpu_custom_call.1} parent=31 // pred_fallthru
        _
      %p298 = scmp.lt.s32.totalorder %s18, 1
      %s299 = scalar_select %p298, %s18, 1
      %s300 = scalar_lea.vmem %s3, %s299
      // Predicated region
      $region41: #{tpu_custom_call.1} parent=31 // pred_check
        %p301 = pneg %p128
      $region42: #{tpu_custom_call.1} parent=31 // pred_check_branch
        %303 = sbr.rel (%p301) target = $region44
      $region43: #{tpu_custom_call.1} parent=31 // pred_region
        _
      $region44: #{tpu_custom_call.1} parent=31 // pred_fallthru
        _
    $region32: #{tpu_custom_call.1} parent=5 // pred_fallthru
      _
    %p304 = scmp.le.s32.totalorder 2, %s9
    // Predicated region
    $region45: #{tpu_custom_call.1} parent=5 // pred_check
      %p305 = pneg %p304
    $region46: #{tpu_custom_call.1} parent=5 // pred_check_branch
      %307 = sbr.rel (%p305) target = $region48
    $region47: #{tpu_custom_call.1} parent=5 // pred_region
      %s308 = ssub.s32 %s9, 2
      // Predicated region
      $region49: #{tpu_custom_call.1} parent=47 // pred_check
        %p309 = pneg %p134
      $region50: #{tpu_custom_call.1} parent=47 // pred_check_branch
        %311 = sbr.rel (%p309) target = $region52
      $region51: #{tpu_custom_call.1} parent=47 // pred_region
        %p312 = scmp.lt.s32.totalorder %s20, 1
        %s313 = scalar_select %p312, %s20, 1
        %s314 = scalar_lea.vmem %s3, %s313
      $region52: #{tpu_custom_call.1} parent=47 // pred_fallthru
        _
    $region48: #{tpu_custom_call.1} parent=5 // pred_fallthru
      _
  $region6: #{tpu_custom_call.1} parent=0 // loop_footer
    %s13 = sadd.s32 1, %s9
  $region7: #{tpu_custom_call.1} parent=0 // loop_footer_branch
    %8 = sbr.rel target = $region3
  $region8: #{tpu_custom_call.1} parent=0 // loop_exit
    _

</llo_original>
